<compile_context>
chip_gen: v7x
topology: tpu7x:2x2x1
jax: 0.10.0
libtpu: 0.0.40
codegen_flags: <defaults>
</compile_context>

<pallas_src>
import functools

import jax
import jax.numpy as jnp
from jax.experimental import pallas as pl
from jax.experimental.pallas import tpu as pltpu

SELU_ALPHA = 1.6732632423543772
SELU_SCALE = 1.0507009873554805
SELU_SCALE_ALPHA = SELU_SCALE * SELU_ALPHA
LN_EPS = 1e-8


def _round_up(x, m):
    return (x + m - 1) // m * m


def _cdiv(a, b):
    return -(-a // b)


def _pwnn_kernel(x_ref, w1_ref, b1_ref, w2_ref, b2_ref, gamma_ref, beta_ref,
                 o_ref, acc_ref, *, true_size, apply_ln, approx_recip):
    ki = pl.program_id(1)
    nk = pl.num_programs(1)

    x = x_ref[...]                              # (rt, size_p), native dtype
    xm = x.astype(w1_ref.dtype)                 # MXU dtype (bf16 fast path)

    # fc1 chunk: (rt, size_p) @ (size_p, it) with f32 accumulation, + bias,
    # SELU (elementwise along inner, so per-chunk application is exact).
    h = jnp.dot(xm, w1_ref[...], preferred_element_type=jnp.float32)
    h = h + b1_ref[...].astype(jnp.float32)
    # SELU with the scale folded into each branch (fewer VALU muls); exp is EUP.
    h = jnp.where(h > 0, SELU_SCALE * h, SELU_SCALE_ALPHA * (jnp.exp(h) - 1.0))

    # fc2 chunk contribution, accumulated in f32 across the inner grid axis.
    contrib = jnp.dot(h.astype(w2_ref.dtype), w2_ref[...],
                      preferred_element_type=jnp.float32)

    @pl.when(ki == 0)
    def _():
        acc_ref[...] = jnp.zeros_like(acc_ref)

    acc_ref[...] += contrib

    @pl.when(ki == nk - 1)
    def _():
        y = acc_ref[...] + b2_ref[...].astype(jnp.float32)
        # TODO(synk): dropout is identity here (inference / eval mode), no RNG mask.
        z = y + x.astype(jnp.float32)           # residual

        if not apply_ln:                        # LayerNorm skipped when seq_len == 1
            o_ref[...] = z.astype(o_ref.dtype)
        else:
            # Hand-rolled PyTorch LayerNorm semantics: unbiased std (ddof=1),
            # eps added to the std.  Stats masked to the true feature width.
            size_p = z.shape[-1]
            if true_size == size_p:
                mu = jnp.mean(z, axis=-1, keepdims=True)
                d = z - mu
            else:
                lane = jax.lax.broadcasted_iota(jnp.int32, (1, size_p), 1)
                mask = lane < true_size
                mu = (jnp.sum(jnp.where(mask, z, 0.0), axis=-1, keepdims=True)
                      / true_size)
                d = jnp.where(mask, z - mu, 0.0)
            var = jnp.sum(d * d, axis=-1, keepdims=True) / max(true_size - 1, 1)
            denom = jnp.sqrt(var) + LN_EPS
            if approx_recip:
                inv = pl.reciprocal(denom, approx=True)   # EUP slot, off the VALU
            else:
                inv = 1.0 / denom                         # exact, f32 parity
            out = (d * inv * gamma_ref[...].astype(jnp.float32)
                   + beta_ref[...].astype(jnp.float32))
            o_ref[...] = out.astype(o_ref.dtype)


@functools.partial(jax.jit, static_argnames=("inner_tile", "matmul_dtype"))
def position_wise_nn(x, w1, b1, w2, b2, gamma, beta, *,
                     inner_tile=None, matmul_dtype=None):
    """x: (batch, seq, size).  Returns (batch, seq, size)."""
    batch, seq, size = x.shape
    inner = w1.shape[1]
    rows = batch * seq

    if matmul_dtype is not None:
        # Optional host-side pre-cast of the MXU operands (e.g. bf16); the
        # kernel keeps f32 accumulation so accuracy loss stays small.
        w1 = w1.astype(matmul_dtype)
        w2 = w2.astype(matmul_dtype)

    x_bytes = jnp.dtype(x.dtype).itemsize
    w_bytes = jnp.dtype(w1.dtype).itemsize

    # ---- generation-aware VMEM budget ------------------------------------
    try:
        vmem_cap = int(pltpu.get_tpu_info().vmem_capacity_bytes)
    except Exception:                       # conservative fallback: fits v7x too
        vmem_cap = 64 * 1024 * 1024
    vmem_target = int(vmem_cap * 0.85)      # headroom for compiler scratch/spill

    # Lane-dense padding targets (MXU / vst friendly).
    size_p = _round_up(size, 128)
    inner_p = _round_up(inner, 128)

    # ---- inner-dim tiling (only when weights would not stay resident) ----
    weights_single = 2 * size_p * inner_p * w_bytes
    if inner_tile is not None:
        it = _round_up(min(inner_tile, inner_p), 128)
    elif weights_single <= vmem_target // 3:
        it = inner_p                        # both weights stay resident
    else:
        it = vmem_target // (3 * 4 * size_p * w_bytes)   # double-buffered chunks
        it = max(128, min(inner_p, (it // 128) * 128))
    n_inner = _cdiv(inner_p, it)
    it = _round_up(_cdiv(inner_p, n_inner), 128)          # balance inner chunks
    inner_pad = n_inner * it

    weights_const = n_inner == 1            # constant index map -> single-buffer
    wbufs = 1 if weights_const else 2
    weight_resident = (wbufs * 2 * size_p * it * w_bytes  # w1 + w2 blocks
                       + wbufs * it * w_bytes             # b1 block
                       + 3 * size_p * w_bytes)            # b2, gamma, beta

    # ---- row tile sized from the remaining VMEM budget --------------------
    per_row = (2 * size_p * x_bytes         # x tile, double-buffered
               + 2 * size_p * x_bytes       # out tile, double-buffered
               + size_p * 4                 # f32 accumulator scratch
               + it * 4                     # f32 h chunk
               + 4 * size_p * 4)            # f32 epilogue temporaries
    rt_budget = (vmem_target - weight_resident - (4 << 20)) // per_row
    rt_budget = max(8, min(1024, (rt_budget // 8) * 8))

    # Balanced row padding (< 8 pad rows per tile) and >=2 grid steps when
    # possible, so both v7x TensorCores get work ("parallel" row axis).
    n_row = _cdiv(rows, rt_budget)
    if n_row < 2 and rows > 8:
        n_row = 2
    rt = _round_up(_cdiv(rows, n_row), 8)
    rows_p = n_row * rt

    # ---- host-side padding, elided entirely when dims are already aligned --
    x2 = x.reshape(rows, size)
    if rows_p != rows or size_p != size:
        x2 = jnp.pad(x2, ((0, rows_p - rows), (0, size_p - size)))
    w1_p = w1 if (size_p == size and inner_pad == inner) else jnp.pad(
        w1, ((0, size_p - size), (0, inner_pad - inner)))
    b1_p = (b1 if inner_pad == inner
            else jnp.pad(b1, (0, inner_pad - inner))).reshape(1, inner_pad)
    w2_p = w2 if (inner_pad == inner and size_p == size) else jnp.pad(
        w2, ((0, inner_pad - inner), (0, size_p - size)))
    b2_p = (b2 if size_p == size
            else jnp.pad(b2, (0, size_p - size))).reshape(1, size_p)
    gamma_p = (gamma if size_p == size
               else jnp.pad(gamma, (0, size_p - size))).reshape(1, size_p)
    beta_p = (beta if size_p == size
              else jnp.pad(beta, (0, size_p - size))).reshape(1, size_p)

    # ---- VMEM limit: actual footprint (+25% + 2 MiB), capped at the target --
    est = (weight_resident
           + 4 * rt * size_p * x_bytes
           + rt * size_p * 4
           + rt * it * 4
           + 4 * rt * size_p * 4)
    vmem_limit = int(min(vmem_target, max(int(est * 1.25) + (2 << 20), 32 << 20)))

    const_kw = dict(pipeline_mode=pl.Buffered(1))   # constant index -> 1 buffer
    w_kw = const_kw if weights_const else {}        # chunked weights stay 2-deep
    # NOTE: on v5e (128 MiB VMEM, ~0.8 TB/s HBM) a Buffered(3) sweep on the
    # x / out specs may help hide DMA latency; left at the default here.

    kernel = functools.partial(
        _pwnn_kernel, true_size=size, apply_ln=(seq != 1),
        approx_recip=(x.dtype != jnp.float32))

    out2 = pl.pallas_call(
        kernel,
        out_shape=jax.ShapeDtypeStruct((rows_p, size_p), x.dtype),
        grid_spec=pltpu.PrefetchScalarGridSpec(
            num_scalar_prefetch=0,
            grid=(n_row, n_inner),
            in_specs=[
                pl.BlockSpec((rt, size_p), lambda i, k: (i, 0)),           # x
                pl.BlockSpec((size_p, it), lambda i, k: (0, k), **w_kw),   # w1
                pl.BlockSpec((1, it), lambda i, k: (0, k), **w_kw),        # b1
                pl.BlockSpec((it, size_p), lambda i, k: (k, 0), **w_kw),   # w2
                pl.BlockSpec((1, size_p), lambda i, k: (0, 0), **const_kw),  # b2
                pl.BlockSpec((1, size_p), lambda i, k: (0, 0), **const_kw),  # gamma
                pl.BlockSpec((1, size_p), lambda i, k: (0, 0), **const_kw),  # beta
            ],
            out_specs=pl.BlockSpec((rt, size_p), lambda i, k: (i, 0)),
            scratch_shapes=[pltpu.VMEM((rt, size_p), jnp.float32)]),
        compiler_params=pltpu.CompilerParams(
            dimension_semantics=("parallel", "arbitrary"),
            vmem_limit_bytes=vmem_limit),
    )(x2, w1_p, b1_p, w2_p, b2_p, gamma_p, beta_p)

    if rows_p != rows or size_p != size:
        out2 = out2[:rows, :size]
    return out2.reshape(batch, seq, size)


def _reference(x, w1, b1, w2, b2, gamma, beta):
    """Pure-JAX f32 reference mirroring the PyTorch forward (eval mode)."""
    xf = x.astype(jnp.float32)
    h = xf @ w1.astype(jnp.float32) + b1.astype(jnp.float32)
    h = SELU_SCALE * jnp.where(h > 0, h, SELU_ALPHA * (jnp.exp(h) - 1.0))
    y = h @ w2.astype(jnp.float32) + b2.astype(jnp.float32)
    z = y + xf
    if x.shape[1] == 1:
        return z
    mu = jnp.mean(z, axis=-1, keepdims=True)
    std = jnp.std(z, axis=-1, keepdims=True, ddof=1)
    return ((z - mu) / (std + LN_EPS) * gamma.astype(jnp.float32)
            + beta.astype(jnp.float32))


if __name__ == "__main__":
    key = jax.random.PRNGKey(0)

    def make(batch, seq, size, inner, dtype=jnp.float32):
        k1, k2, k3, k4, kx = jax.random.split(
            jax.random.fold_in(key, size * 131 + inner), 5)
        w1 = (jax.random.normal(k1, (size, inner), jnp.float32)
              / jnp.sqrt(jnp.float32(size))).astype(dtype)
        b1 = (jax.random.normal(k2, (inner,), jnp.float32) * 0.01).astype(dtype)
        w2 = (jax.random.normal(k3, (inner, size), jnp.float32)
              / jnp.sqrt(jnp.float32(inner))).astype(dtype)
        b2 = (jax.random.normal(k4, (size,), jnp.float32) * 0.01).astype(dtype)
        gamma = jnp.ones((size,), dtype)
        beta = jnp.zeros((size,), dtype)
        x = jax.random.normal(kx, (batch, seq, size), jnp.float32).astype(dtype)
        return x, w1, b1, w2, b2, gamma, beta

    # 1) f32 path, small shapes: batch=2, seq=8, size=32, inner=64.
    args = make(2, 8, 32, 64)
    out = jax.block_until_ready(position_wise_nn(*args))
    ref = _reference(*args)
    assert out.shape == (2, 8, 32)
    err = float(jnp.max(jnp.abs(out - ref)))
    assert err < 2e-2, err

    # 2) bf16 fast path (native-dtype MXU matmuls, f32 accumulation).
    args16 = tuple(a.astype(jnp.bfloat16) for a in args)
    out_bf = jax.block_until_ready(position_wise_nn(*args16)).astype(jnp.float32)
    assert out_bf.shape == (2, 8, 32)
    assert bool(jnp.all(jnp.isfinite(out_bf)))
    err_bf = float(jnp.max(jnp.abs(out_bf - ref)))
    assert err_bf < 0.25, err_bf

    # 3) forced inner-dim tiling (reduction grid axis + f32 accumulator) and
    #    masked LayerNorm stats (size not a multiple of 128), f32.
    args3 = make(2, 8, 64, 320)
    out3 = jax.block_until_ready(position_wise_nn(*args3, inner_tile=128))
    ref3 = _reference(*args3)
    err3 = float(jnp.max(jnp.abs(out3 - ref3)))
    assert err3 < 2e-2, err3

    # 4) f32 activations with weights pre-cast to bf16 for the MXU.
    out4 = jax.block_until_ready(
        position_wise_nn(*args, matmul_dtype=jnp.bfloat16)).astype(jnp.float32)
    err4 = float(jnp.max(jnp.abs(out4 - ref)))
    assert err4 < 0.25, err4

    print("KERNEL_OK")
</pallas_src>

<mosaic_0001>
module attributes {stable_mosaic.version = 11 : i64} {
  func.func @_pwnn_kernel(%arg0: i32, %arg1: i32, %arg2: memref<8x128xf32, #tpu.memory_space<vmem>>, %arg3: memref<128x128xf32, #tpu.memory_space<vmem>>, %arg4: memref<1x128xf32, #tpu.memory_space<vmem>>, %arg5: memref<128x128xf32, #tpu.memory_space<vmem>>, %arg6: memref<1x128xf32, #tpu.memory_space<vmem>>, %arg7: memref<1x128xf32, #tpu.memory_space<vmem>>, %arg8: memref<1x128xf32, #tpu.memory_space<vmem>>, %arg9: memref<8x128xf32, #tpu.memory_space<vmem>>, %arg10: memref<8x128xf32, #tpu.memory_space<vmem>>) attributes {dimension_semantics = [#tpu.dimension_semantics<parallel>, #tpu.dimension_semantics<arbitrary>], iteration_bounds = array<i64: 2, 1>, scalar_prefetch = 0 : i64, scratch_operands = 1 : i64, tpu.core_type = #tpu.core_type<tc>, window_params = [{transform_indices = @transform_0, window_bounds = array<i64: 8, 128>}, {pipeline_mode = #tpu.pipeline_mode<synchronous>, transform_indices = @transform_1, window_bounds = array<i64: 128, 128>}, {pipeline_mode = #tpu.pipeline_mode<synchronous>, transform_indices = @transform_2, window_bounds = array<i64: 1, 128>}, {pipeline_mode = #tpu.pipeline_mode<synchronous>, transform_indices = @transform_3, window_bounds = array<i64: 128, 128>}, {pipeline_mode = #tpu.pipeline_mode<synchronous>, transform_indices = @transform_4, window_bounds = array<i64: 1, 128>}, {pipeline_mode = #tpu.pipeline_mode<synchronous>, transform_indices = @transform_5, window_bounds = array<i64: 1, 128>}, {pipeline_mode = #tpu.pipeline_mode<synchronous>, transform_indices = @transform_6, window_bounds = array<i64: 1, 128>}, {transform_indices = @transform_7, window_bounds = array<i64: 8, 128>}]} {
    %c0 = arith.constant 0 : index
    %c0_0 = arith.constant 0 : index
    %0 = vector.load %arg2[%c0, %c0_0] : memref<8x128xf32, #tpu.memory_space<vmem>>, vector<8x128xf32>
    %c0_1 = arith.constant 0 : index
    %c0_2 = arith.constant 0 : index
    %1 = vector.load %arg3[%c0_1, %c0_2] : memref<128x128xf32, #tpu.memory_space<vmem>>, vector<128x128xf32>
    %cst = arith.constant dense<0.000000e+00> : vector<8x128xf32>
    %2 = tpu.matmul %0, %1, %cst {dimension_numbers = #tpu.dot_dimension_numbers<[1], [0], [0], [1], [0, 0, 1, 1], [], []>} : vector<8x128xf32>, vector<128x128xf32>, vector<8x128xf32> -> vector<8x128xf32>
    %c0_3 = arith.constant 0 : index
    %c0_4 = arith.constant 0 : index
    %3 = vector.load %arg4[%c0_3, %c0_4] : memref<1x128xf32, #tpu.memory_space<vmem>>, vector<1x128xf32>
    %4 = vector.broadcast %3 : vector<1x128xf32> to vector<8x128xf32>
    %5 = arith.addf %2, %4 : vector<8x128xf32>
    %cst_5 = arith.constant 0.000000e+00 : f32
    %6 = vector.broadcast %cst_5 : f32 to vector<8x128xf32>
    %7 = arith.cmpf ogt, %5, %6 : vector<8x128xf32>
    %cst_6 = arith.constant 1.05070102 : f32
    %8 = vector.broadcast %cst_6 : f32 to vector<8x128xf32>
    %9 = arith.mulf %8, %5 : vector<8x128xf32>
    %10 = math.exp %5 : vector<8x128xf32>
    %cst_7 = arith.constant 1.000000e+00 : f32
    %11 = vector.broadcast %cst_7 : f32 to vector<8x128xf32>
    %12 = arith.subf %10, %11 : vector<8x128xf32>
    %cst_8 = arith.constant 1.75809932 : f32
    %13 = vector.broadcast %cst_8 : f32 to vector<8x128xf32>
    %14 = arith.mulf %13, %12 : vector<8x128xf32>
    %15 = arith.select %7, %9, %14 : vector<8x128xi1>, vector<8x128xf32>
    %c0_9 = arith.constant 0 : index
    %c0_10 = arith.constant 0 : index
    %16 = vector.load %arg5[%c0_9, %c0_10] : memref<128x128xf32, #tpu.memory_space<vmem>>, vector<128x128xf32>
    %cst_11 = arith.constant dense<0.000000e+00> : vector<8x128xf32>
    %17 = tpu.matmul %15, %16, %cst_11 {dimension_numbers = #tpu.dot_dimension_numbers<[1], [0], [0], [1], [0, 0, 1, 1], [], []>} : vector<8x128xf32>, vector<128x128xf32>, vector<8x128xf32> -> vector<8x128xf32>
    %c0_i32 = arith.constant 0 : i32
    %18 = arith.cmpi eq, %arg1, %c0_i32 : i32
    %19 = arith.extui %18 : i1 to i32
    %c0_i32_12 = arith.constant 0 : i32
    %20 = arith.cmpi ne, %19, %c0_i32_12 : i32
    scf.if %20 {
      %cst_19 = arith.constant 0.000000e+00 : f32
      %27 = vector.broadcast %cst_19 : f32 to vector<8x128xf32>
      %c0_20 = arith.constant 0 : index
      %c0_21 = arith.constant 0 : index
      %28 = vector.load %arg10[%c0_20, %c0_21] : memref<8x128xf32, #tpu.memory_space<vmem>>, vector<8x128xf32>
      tpu.vector_store %arg10[%c0_20, %c0_21], %27 {strides = array<i32>} : memref<8x128xf32, #tpu.memory_space<vmem>>, vector<8x128xf32>,
    } else {
    }
    %c0_13 = arith.constant 0 : index
    %c0_14 = arith.constant 0 : index
    %21 = vector.load %arg10[%c0_13, %c0_14] : memref<8x128xf32, #tpu.memory_space<vmem>>, vector<8x128xf32>
    %22 = arith.addf %21, %17 : vector<8x128xf32>
    %c0_15 = arith.constant 0 : index
    %c0_16 = arith.constant 0 : index
    %23 = vector.load %arg10[%c0_15, %c0_16] : memref<8x128xf32, #tpu.memory_space<vmem>>, vector<8x128xf32>
    tpu.vector_store %arg10[%c0_15, %c0_16], %22 {strides = array<i32>} : memref<8x128xf32, #tpu.memory_space<vmem>>, vector<8x128xf32>,
    %c0_i32_17 = arith.constant 0 : i32
    %24 = arith.cmpi eq, %arg1, %c0_i32_17 : i32
    %25 = arith.extui %24 : i1 to i32
    %c0_i32_18 = arith.constant 0 : i32
    %26 = arith.cmpi ne, %25, %c0_i32_18 : i32
    scf.if %26 {
      %c0_19 = arith.constant 0 : index
      %c0_20 = arith.constant 0 : index
      %27 = vector.load %arg10[%c0_19, %c0_20] : memref<8x128xf32, #tpu.memory_space<vmem>>, vector<8x128xf32>
      %c0_21 = arith.constant 0 : index
      %c0_22 = arith.constant 0 : index
      %28 = vector.load %arg6[%c0_21, %c0_22] : memref<1x128xf32, #tpu.memory_space<vmem>>, vector<1x128xf32>
      %29 = vector.broadcast %28 : vector<1x128xf32> to vector<8x128xf32>
      %30 = arith.addf %27, %29 : vector<8x128xf32>
      %31 = arith.addf %30, %0 : vector<8x128xf32>
      %32 = tpu.iota {dimensions = array<i32: 1>} : vector<1x128xi32>
      %c32_i32 = arith.constant 32 : i32
      %33 = vector.broadcast %c32_i32 : i32 to vector<1x128xi32>
      %34 = arith.cmpi slt, %32, %33 : vector<1x128xi32>
      %cst_23 = arith.constant 0.000000e+00 : f32
      %35 = vector.shape_cast %34 : vector<1x128xi1> to vector<1x128xi1>
      %36 = vector.broadcast %35 : vector<1x128xi1> to vector<8x128xi1>
      %37 = vector.broadcast %cst_23 : f32 to vector<8x128xf32>
      %38 = arith.select %36, %31, %37 : vector<8x128xi1>, vector<8x128xf32>
      %cst_24 = arith.constant dense<0.000000e+00> : vector<8xf32>
      %39 = vector.multi_reduction <add>, %38, %cst_24 [1] : vector<8x128xf32> to vector<8xf32>
      %40 = vector.shape_cast %39 : vector<8xf32> to vector<8x1xf32>
      %cst_25 = arith.constant 3.200000e+01 : f32
      %41 = vector.broadcast %cst_25 : f32 to vector<8x1xf32>
      %42 = arith.divf %40, %41 : vector<8x1xf32>
      %43 = vector.broadcast %42 : vector<8x1xf32> to vector<8x128xf32>
      %44 = arith.subf %31, %43 : vector<8x128xf32>
      %cst_26 = arith.constant 0.000000e+00 : f32
      %45 = vector.shape_cast %34 : vector<1x128xi1> to vector<1x128xi1>
      %46 = vector.broadcast %45 : vector<1x128xi1> to vector<8x128xi1>
      %47 = vector.broadcast %cst_26 : f32 to vector<8x128xf32>
      %48 = arith.select %46, %44, %47 : vector<8x128xi1>, vector<8x128xf32>
      %49 = arith.mulf %48, %48 : vector<8x128xf32>
      %cst_27 = arith.constant dense<0.000000e+00> : vector<8xf32>
      %50 = vector.multi_reduction <add>, %49, %cst_27 [1] : vector<8x128xf32> to vector<8xf32>
      %51 = vector.shape_cast %50 : vector<8xf32> to vector<8x1xf32>
      %cst_28 = arith.constant 3.100000e+01 : f32
      %52 = vector.broadcast %cst_28 : f32 to vector<8x1xf32>
      %53 = arith.divf %51, %52 : vector<8x1xf32>
      %54 = math.sqrt %53 : vector<8x1xf32>
      %cst_29 = arith.constant 9.99999993E-9 : f32
      %55 = vector.broadcast %cst_29 : f32 to vector<8x1xf32>
      %56 = arith.addf %54, %55 : vector<8x1xf32>
      %cst_30 = arith.constant 1.000000e+00 : f32
      %57 = vector.broadcast %cst_30 : f32 to vector<8x1xf32>
      %58 = arith.divf %57, %56 : vector<8x1xf32>
      %59 = vector.broadcast %58 : vector<8x1xf32> to vector<8x128xf32>
      %60 = arith.mulf %48, %59 : vector<8x128xf32>
      %c0_31 = arith.constant 0 : index
      %c0_32 = arith.constant 0 : index
      %61 = vector.load %arg7[%c0_31, %c0_32] : memref<1x128xf32, #tpu.memory_space<vmem>>, vector<1x128xf32>
      %62 = vector.broadcast %61 : vector<1x128xf32> to vector<8x128xf32>
      %63 = arith.mulf %60, %62 : vector<8x128xf32>
      %c0_33 = arith.constant 0 : index
      %c0_34 = arith.constant 0 : index
      %64 = vector.load %arg8[%c0_33, %c0_34] : memref<1x128xf32, #tpu.memory_space<vmem>>, vector<1x128xf32>
      %65 = vector.broadcast %64 : vector<1x128xf32> to vector<8x128xf32>
      %66 = arith.addf %63, %65 : vector<8x128xf32>
      %c0_35 = arith.constant 0 : index
      %c0_36 = arith.constant 0 : index
      %67 = vector.load %arg9[%c0_35, %c0_36] : memref<8x128xf32, #tpu.memory_space<vmem>>, vector<8x128xf32>
      tpu.vector_store %arg9[%c0_35, %c0_36], %66 {strides = array<i32>} : memref<8x128xf32, #tpu.memory_space<vmem>>, vector<8x128xf32>,
    } else {
    }
    return
  }
  func.func @transform_0(%arg0: i32, %arg1: i32) -> (i32, i32) {
    %c0_i32 = arith.constant 0 : i32
    %c0_i32_0 = arith.constant 0 : i32
    return %arg0, %c0_i32 : i32, i32
  }
  func.func @transform_1(%arg0: i32, %arg1: i32) -> (i32, i32) {
    %c0_i32 = arith.constant 0 : i32
    %c0_i32_0 = arith.constant 0 : i32
    return %c0_i32, %arg1 : i32, i32
  }
  func.func @transform_2(%arg0: i32, %arg1: i32) -> (i32, i32) {
    %c0_i32 = arith.constant 0 : i32
    %c0_i32_0 = arith.constant 0 : i32
    return %c0_i32, %arg1 : i32, i32
  }
  func.func @transform_3(%arg0: i32, %arg1: i32) -> (i32, i32) {
    %c0_i32 = arith.constant 0 : i32
    %c0_i32_0 = arith.constant 0 : i32
    return %arg1, %c0_i32 : i32, i32
  }
  func.func @transform_4(%arg0: i32, %arg1: i32) -> (i32, i32) {
    %c0_i32 = arith.constant 0 : i32
    %c0_i32_0 = arith.constant 0 : i32
    %c0_i32_1 = arith.constant 0 : i32
    return %c0_i32, %c0_i32_0 : i32, i32
  }
  func.func @transform_5(%arg0: i32, %arg1: i32) -> (i32, i32) {
    %c0_i32 = arith.constant 0 : i32
    %c0_i32_0 = arith.constant 0 : i32
    %c0_i32_1 = arith.constant 0 : i32
    return %c0_i32, %c0_i32_0 : i32, i32
  }
  func.func @transform_6(%arg0: i32, %arg1: i32) -> (i32, i32) {
    %c0_i32 = arith.constant 0 : i32
    %c0_i32_0 = arith.constant 0 : i32
    %c0_i32_1 = arith.constant 0 : i32
    return %c0_i32, %c0_i32_0 : i32, i32
  }
  func.func @transform_7(%arg0: i32, %arg1: i32) -> (i32, i32) {
    %c0_i32 = arith.constant 0 : i32
    %c0_i32_0 = arith.constant 0 : i32
    return %arg0, %c0_i32 : i32, i32
  }
}

</mosaic_0001>

<llo_original>
// kernel: position_wise_nn.1
$region0: #{position_wise_nn.1}
  #allocation0 [shape = 'u32[]', space=smem, size = 0x4, offset = 0x4, fixed_abs, tag = 'smem constant byte address 0x4 - core index']
  #allocation1 [shape = 'u32[144,128]{1,0:T(1,128)}', space=vmem, size = 0x12000, scoped, tag = 'internal scratch']
  #allocation2 [shape = 'f32[8,128]{1,0:T(8,128)}', space=vmem, size = 0x1000, scoped, tag = 'scratch operand']
  %s0 = inlined_call_operand.vmem [shape: f32[16,128], index: 0, kind: input, shape index: {}]
  %s1 = inlined_call_operand.vmem [shape: f32[128,128], index: 1, kind: input, shape index: {}]
  %s2 = inlined_call_operand.vmem [shape: f32[1,128], index: 2, kind: input, shape index: {}]
  %s3 = inlined_call_operand.vmem [shape: f32[128,128], index: 3, kind: input, shape index: {}]
  %s4 = inlined_call_operand.vmem [shape: f32[1,128], index: 4, kind: input, shape index: {}]
  %s5 = inlined_call_operand.vmem [shape: f32[1,128], index: 5, kind: input, shape index: {}]
  %s6 = inlined_call_operand.vmem [shape: f32[1,128], index: 6, kind: input, shape index: {}]
  %s7 = inlined_call_operand.vmem [shape: f32[16,128], index: 7, kind: output, shape index: {}]
  %s8 = sld [smem:[#allocation0]]
  $region69: #{position_wise_nn.1} parent=0
    _
  %s10 = ssub.s32 1, %s8
  %s11 = scalar_select 0, %s10, %s8
  loop: start=0, step=1, limit=4
  $region2: #{position_wise_nn.1} parent=0 // loop_pre_header
    _
  $region3: #{position_wise_nn.1} parent=0 // loop_header
    %s13 = sphi 0, %s17
    %p14 = scmp.ge.s32.totalorder %s13, 4
    %s20 = sphi 0, %s32
    %s21 = sphi 0, %s28
    %s22 = sphi 0, %s20
    %s23 = sphi 0, %s21
    %s24 = sphi 0, %s22
    %s25 = sphi 0, %s23
    %s35 = sphi 0, %s37
    %s38 = sphi 0, %s35
    %s39 = sphi 0, %s38
    %s55 = sphi 0, %s39
    %s61 = sphi 0, %s63
    %s64 = sphi 0, %s61
    %s65 = sphi 0, %s64
    %s81 = sphi 0, %s65
    %s87 = sphi 0, %s89
    %s90 = sphi 0, %s87
    %s91 = sphi 0, %s90
    %s107 = sphi 0, %s91
    %s113 = sphi 0, %s115
    %s116 = sphi 0, %s113
    %s117 = sphi 0, %s116
    %s133 = sphi 0, %s117
    %s137 = sphi 0, %s137
    %s139 = sphi 0, %s137
    %s140 = sphi 0, %s139
    %s154 = sphi 0, %s140
    %s158 = sphi 0, %s158
    %s160 = sphi 0, %s158
    %s161 = sphi 0, %s160
    %s175 = sphi 0, %s161
    %s179 = sphi 0, %s179
    %s181 = sphi 0, %s179
    %s182 = sphi 0, %s181
    %s196 = sphi 0, %s182
    %s202 = sphi 0, %s204
    %s205 = sphi 0, %s202
    %s206 = sphi 0, %s205
    %s222 = sphi 0, %s206
  $region4: #{position_wise_nn.1} parent=0 // loop_header_branch
    %16 = sbr.rel (%p14) target = $region8
  $region5: #{position_wise_nn.1} parent=0 // loop_body
    %s18 = ssub.s32 %s13, 1
    %s19 = ssub.s32 %s13, 2
    %s26 = sadd.s32 1, %s21
    %p27 = scmp.ge.s32.totalorder %s26, 1
    %s28 = scalar_select %p27, 0, %s26
    %s29 = sadd.s32 1, %s20
    %s30 = scalar_select %p27, %s29, %s20
    %p31 = scmp.ge.s32.totalorder %s30, 2
    %s32 = scalar_select %p31, 0, %s30
    %s33 = ssub.s32 %s20, %s32
    %p34 = scmp.eq.s32.totalorder %s33, 0
    %s36 = sadd.s32 %s35, 1
    %s37 = scalar_select %p34, %s35, %s36
    %p40 = pneg %p34
    %p41 = scmp.eq.s32.totalorder %s13, 1
    %p42 = por %p40, %p41
    %p43 = scmp.ne.s32.totalorder %s35, %s38
    %p44 = scmp.eq.s32.totalorder %s13, 0
    %p45 = por %p43, %p44
    %p46 = scmp.ne.s32.totalorder %s35, %s38
    %p47 = scmp.eq.s32.totalorder %s18, 1
    %p48 = por %p46, %p47
    %p49 = scmp.ne.s32.totalorder %s38, %s39
    %p50 = scmp.eq.s32.totalorder %s18, 0
    %p51 = por %p49, %p50
    %p52 = scmp.ne.s32.totalorder %s38, %s39
    %p53 = scmp.eq.s32.totalorder %s19, 1
    %p54 = por %p52, %p53
    %p56 = scmp.ne.s32.totalorder %s39, %s55
    %p57 = scmp.eq.s32.totalorder %s19, 0
    %p58 = por %p56, %p57
    %s59 = ssub.s32 %s21, %s28
    %p60 = scmp.eq.s32.totalorder %s59, 0
    %s62 = sadd.s32 %s61, 1
    %s63 = scalar_select %p60, %s61, %s62
    %p66 = pneg %p60
    %p67 = scmp.eq.s32.totalorder %s13, 1
    %p68 = por %p66, %p67
    %p69 = scmp.ne.s32.totalorder %s61, %s64
    %p70 = scmp.eq.s32.totalorder %s13, 0
    %p71 = por %p69, %p70
    %p72 = scmp.ne.s32.totalorder %s61, %s64
    %p73 = scmp.eq.s32.totalorder %s18, 1
    %p74 = por %p72, %p73
    %p75 = scmp.ne.s32.totalorder %s64, %s65
    %p76 = scmp.eq.s32.totalorder %s18, 0
    %p77 = por %p75, %p76
    %p78 = scmp.ne.s32.totalorder %s64, %s65
    %p79 = scmp.eq.s32.totalorder %s19, 1
    %p80 = por %p78, %p79
    %p82 = scmp.ne.s32.totalorder %s65, %s81
    %p83 = scmp.eq.s32.totalorder %s19, 0
    %p84 = por %p82, %p83
    %s85 = ssub.s32 %s21, %s28
    %p86 = scmp.eq.s32.totalorder %s85, 0
    %s88 = sadd.s32 %s87, 1
    %s89 = scalar_select %p86, %s87, %s88
    %p92 = pneg %p86
    %p93 = scmp.eq.s32.totalorder %s13, 1
    %p94 = por %p92, %p93
    %p95 = scmp.ne.s32.totalorder %s87, %s90
    %p96 = scmp.eq.s32.totalorder %s13, 0
    %p97 = por %p95, %p96
    %p98 = scmp.ne.s32.totalorder %s87, %s90
    %p99 = scmp.eq.s32.totalorder %s18, 1
    %p100 = por %p98, %p99
    %p101 = scmp.ne.s32.totalorder %s90, %s91
    %p102 = scmp.eq.s32.totalorder %s18, 0
    %p103 = por %p101, %p102
    %p104 = scmp.ne.s32.totalorder %s90, %s91
    %p105 = scmp.eq.s32.totalorder %s19, 1
    %p106 = por %p104, %p105
    %p108 = scmp.ne.s32.totalorder %s91, %s107
    %p109 = scmp.eq.s32.totalorder %s19, 0
    %p110 = por %p108, %p109
    %s111 = ssub.s32 %s21, %s28
    %p112 = scmp.eq.s32.totalorder %s111, 0
    %s114 = sadd.s32 %s113, 1
    %s115 = scalar_select %p112, %s113, %s114
    %p118 = pneg %p112
    %p119 = scmp.eq.s32.totalorder %s13, 1
    %p120 = por %p118, %p119
    %p121 = scmp.ne.s32.totalorder %s113, %s116
    %p122 = scmp.eq.s32.totalorder %s13, 0
    %p123 = por %p121, %p122
    %p124 = scmp.ne.s32.totalorder %s113, %s116
    %p125 = scmp.eq.s32.totalorder %s18, 1
    %p126 = por %p124, %p125
    %p127 = scmp.ne.s32.totalorder %s116, %s117
    %p128 = scmp.eq.s32.totalorder %s18, 0
    %p129 = por %p127, %p128
    %p130 = scmp.ne.s32.totalorder %s116, %s117
    %p131 = scmp.eq.s32.totalorder %s19, 1
    %p132 = por %p130, %p131
    %p134 = scmp.ne.s32.totalorder %s117, %s133
    %p135 = scmp.eq.s32.totalorder %s19, 0
    %p136 = por %p134, %p135
    %s138 = sadd.s32 %s137, 1
    %p141 = scmp.eq.s32.totalorder %s13, 1
    %p142 = scmp.ne.s32.totalorder %s137, %s139
    %p143 = scmp.eq.s32.totalorder %s13, 0
    %p144 = por %p142, %p143
    %p145 = scmp.ne.s32.totalorder %s137, %s139
    %p146 = scmp.eq.s32.totalorder %s18, 1
    %p147 = por %p145, %p146
    %p148 = scmp.ne.s32.totalorder %s139, %s140
    %p149 = scmp.eq.s32.totalorder %s18, 0
    %p150 = por %p148, %p149
    %p151 = scmp.ne.s32.totalorder %s139, %s140
    %p152 = scmp.eq.s32.totalorder %s19, 1
    %p153 = por %p151, %p152
    %p155 = scmp.ne.s32.totalorder %s140, %s154
    %p156 = scmp.eq.s32.totalorder %s19, 0
    %p157 = por %p155, %p156
    %s159 = sadd.s32 %s158, 1
    %p162 = scmp.eq.s32.totalorder %s13, 1
    %p163 = scmp.ne.s32.totalorder %s158, %s160
    %p164 = scmp.eq.s32.totalorder %s13, 0
    %p165 = por %p163, %p164
    %p166 = scmp.ne.s32.totalorder %s158, %s160
    %p167 = scmp.eq.s32.totalorder %s18, 1
    %p168 = por %p166, %p167
    %p169 = scmp.ne.s32.totalorder %s160, %s161
    %p170 = scmp.eq.s32.totalorder %s18, 0
    %p171 = por %p169, %p170
    %p172 = scmp.ne.s32.totalorder %s160, %s161
    %p173 = scmp.eq.s32.totalorder %s19, 1
    %p174 = por %p172, %p173
    %p176 = scmp.ne.s32.totalorder %s161, %s175
    %p177 = scmp.eq.s32.totalorder %s19, 0
    %p178 = por %p176, %p177
    %s180 = sadd.s32 %s179, 1
    %p183 = scmp.eq.s32.totalorder %s13, 1
    %p184 = scmp.ne.s32.totalorder %s179, %s181
    %p185 = scmp.eq.s32.totalorder %s13, 0
    %p186 = por %p184, %p185
    %p187 = scmp.ne.s32.totalorder %s179, %s181
    %p188 = scmp.eq.s32.totalorder %s18, 1
    %p189 = por %p187, %p188
    %p190 = scmp.ne.s32.totalorder %s181, %s182
    %p191 = scmp.eq.s32.totalorder %s18, 0
    %p192 = por %p190, %p191
    %p193 = scmp.ne.s32.totalorder %s181, %s182
    %p194 = scmp.eq.s32.totalorder %s19, 1
    %p195 = por %p193, %p194
    %p197 = scmp.ne.s32.totalorder %s182, %s196
    %p198 = scmp.eq.s32.totalorder %s19, 0
    %p199 = por %p197, %p198
    %s200 = ssub.s32 %s20, %s32
    %p201 = scmp.eq.s32.totalorder %s200, 0
    %s203 = sadd.s32 %s202, 1
    %s204 = scalar_select %p201, %s202, %s203
    %p207 = pneg %p201
    %p208 = scmp.eq.s32.totalorder %s13, 1
    %p209 = por %p207, %p208
    %p210 = scmp.ne.s32.totalorder %s202, %s205
    %p211 = scmp.eq.s32.totalorder %s13, 0
    %p212 = por %p210, %p211
    %p213 = scmp.ne.s32.totalorder %s202, %s205
    %p214 = scmp.eq.s32.totalorder %s18, 1
    %p215 = por %p213, %p214
    %p216 = scmp.ne.s32.totalorder %s205, %s206
    %p217 = scmp.eq.s32.totalorder %s18, 0
    %p218 = por %p216, %p217
    %p219 = scmp.ne.s32.totalorder %s205, %s206
    %p220 = scmp.eq.s32.totalorder %s19, 1
    %p221 = por %p219, %p220
    %p223 = scmp.ne.s32.totalorder %s206, %s222
    %p224 = scmp.eq.s32.totalorder %s19, 0
    %p225 = por %p223, %p224
    %p226 = scmp.le.s32.totalorder 1, %s13
    %p227 = scmp.lt.s32.totalorder %s13, 3
    %p228 = pnand %p226, %p227
    %p229 = pneg %p228
    // Predicated region
    $region9: #{position_wise_nn.1} parent=5 // pred_check
      _
    $region10: #{position_wise_nn.1} parent=5 // pred_check_branch
      %231 = sbr.rel (%p228) target = $region12
    $region11: #{position_wise_nn.1} parent=5 // pred_region
      %s232 = ssub.s32 %s13, 1
      // Predicated region
      $region13: #{position_wise_nn.1} parent=11 // pred_check
        %p233 = pneg %p77
      $region14: #{position_wise_nn.1} parent=11 // pred_check_branch
        %235 = sbr.rel (%p233) target = $region16
      $region15: #{position_wise_nn.1} parent=11 // pred_region
        %p236 = scmp.lt.s32.totalorder %s23, 0
        %s237 = scalar_select %p236, %s23, 0
        %s238 = smul.addr %s237, 8
        %s239 = scalar_lea.vmem %s1, %s238
      $region16: #{position_wise_nn.1} parent=11 // pred_fallthru
        _
      // Predicated region
      $region17: #{position_wise_nn.1} parent=11 // pred_check
        %p240 = pneg %p103
      $region18: #{position_wise_nn.1} parent=11 // pred_check_branch
        %242 = sbr.rel (%p240) target = $region20
      $region19: #{position_wise_nn.1} parent=11 // pred_region
        %p243 = scmp.lt.s32.totalorder %s23, 0
        %s244 = scalar_select %p243, %s23, 0
        %s245 = scalar_lea.vmem %s2, %s244
      $region20: #{position_wise_nn.1} parent=11 // pred_fallthru
        _
      // Predicated region
      $region21: #{position_wise_nn.1} parent=11 // pred_check
        %p246 = pneg %p129
      $region22: #{position_wise_nn.1} parent=11 // pred_check_branch
        %248 = sbr.rel (%p246) target = $region24
      $region23: #{position_wise_nn.1} parent=11 // pred_region
        %s249 = smul.u32 16, %s23
        %p250 = scmp.lt.s32.totalorder %s249, 15
        %s251 = scalar_select %p250, %s249, 15
        %s252 = smul.addr %s251, 8
        %s253 = scalar_lea.vmem %s3, %s252
        %s254 = smul.u32 16, %s23
      $region24: #{position_wise_nn.1} parent=11 // pred_fallthru
        _
      // Predicated region
      $region25: #{position_wise_nn.1} parent=11 // pred_check
        %p255 = pneg %p150
      $region26: #{position_wise_nn.1} parent=11 // pred_check_branch
        %257 = sbr.rel (%p255) target = $region28
      $region27: #{position_wise_nn.1} parent=11 // pred_region
        _
      $region28: #{position_wise_nn.1} parent=11 // pred_fallthru
        _
      // Predicated region
      $region29: #{position_wise_nn.1} parent=11 // pred_check
        %p258 = pneg %p171
      $region30: #{position_wise_nn.1} parent=11 // pred_check_branch
        %260 = sbr.rel (%p258) target = $region32
      $region31: #{position_wise_nn.1} parent=11 // pred_region
        _
      $region32: #{position_wise_nn.1} parent=11 // pred_fallthru
        _
      // Predicated region
      $region33: #{position_wise_nn.1} parent=11 // pred_check
        %p261 = pneg %p192
      $region34: #{position_wise_nn.1} parent=11 // pred_check_branch
        %263 = sbr.rel (%p261) target = $region36
      $region35: #{position_wise_nn.1} parent=11 // pred_region
        _
      $region36: #{position_wise_nn.1} parent=11 // pred_fallthru
        _
    $region12: #{position_wise_nn.1} parent=5 // pred_fallthru
      _
    %p264 = scmp.lt.s32.totalorder %s13, 2
    // Predicated region
    $region37: #{position_wise_nn.1} parent=5 // pred_check
      %p265 = pneg %p264
    $region38: #{position_wise_nn.1} parent=5 // pred_check_branch
      %267 = sbr.rel (%p265) target = $region40
    $region39: #{position_wise_nn.1} parent=5 // pred_region
      // Predicated region
      $region41: #{position_wise_nn.1} parent=39 // pred_check
        %p268 = pneg %p45
      $region42: #{position_wise_nn.1} parent=39 // pred_check_branch
        %270 = sbr.rel (%p268) target = $region44
      $region43: #{position_wise_nn.1} parent=39 // pred_region
        %p271 = scmp.lt.s32.totalorder %s20, 1
        %s272 = scalar_select %p271, %s20, 1
        %s273 = smul.addr %s272, 8
        %s274 = scalar_lea.vmem %s0, %s273
      $region44: #{position_wise_nn.1} parent=39 // pred_fallthru
        _
    $region40: #{position_wise_nn.1} parent=5 // pred_fallthru
      _
    %p275 = scmp.le.s32.totalorder 1, %s13
    %p276 = scmp.lt.s32.totalorder %s13, 3
    %p277 = pnand %p275, %p276
    %p278 = pneg %p277
    // Predicated region
    $region45: #{position_wise_nn.1} parent=5 // pred_check
      _
    $region46: #{position_wise_nn.1} parent=5 // pred_check_branch
      %280 = sbr.rel (%p277) target = $region48
    $region47: #{position_wise_nn.1} parent=5 // pred_region
      %s281 = ssub.s32 %s13, 1
      %p282 = scmp.lt.s32.totalorder %s22, 1
      %s283 = scalar_select %p282, %s22, 1
      %s284 = smul.addr %s283, 8
      %s285 = scalar_lea.vmem %s0, %s284
      %p286 = pneg %p51
      %p287 = pneg %p48
      %p288 = scmp.lt.s32.totalorder %s23, 0
      %s289 = scalar_select %p288, %s23, 0
      %s290 = smul.addr %s289, 8
      %s291 = scalar_lea.vmem %s1, %s290
      %p292 = pneg %p77
      %p293 = pneg %p74
      %p294 = scmp.lt.s32.totalorder %s23, 0
      %s295 = scalar_select %p294, %s23, 0
      %s296 = scalar_lea.vmem %s2, %s295
      %p297 = pneg %p103
      %p298 = pneg %p100
      %s299 = smul.u32 16, %s23
      %p300 = scmp.lt.s32.totalorder %s299, 15
      %s301 = scalar_select %p300, %s299, 15
      %s302 = smul.addr %s301, 8
      %s303 = scalar_lea.vmem %s3, %s302
      %p304 = pneg %p129
      %p305 = pneg %p126
      %p306 = pneg %p150
      %p307 = pneg %p147
      %p308 = pneg %p171
      %p309 = pneg %p168
      %p310 = pneg %p192
      %p311 = pneg %p189
      %p312 = pneg %p218
      %p313 = pneg %p215
      %p314 = scmp.lt.s32.totalorder %s22, 1
      %s315 = scalar_select %p314, %s22, 1
      %s316 = smul.addr %s315, 8
      %s317 = scalar_lea.vmem %s7, %s316
      %p318 = scmp.lt.s32.totalorder %s22, 1
      %s319 = scalar_select %p318, %s22, 1
      %s320 = smul.addr %s319, 8
      %s321 = scalar_lea.vmem %s0, %s320
      %p322 = scmp.lt.s32.totalorder %s23, 0
      %s323 = scalar_select %p322, %s23, 0
      %s324 = smul.addr %s323, 8
      %s325 = scalar_lea.vmem %s1, %s324
      %p326 = scmp.lt.s32.totalorder %s23, 0
      %s327 = scalar_select %p326, %s23, 0
      %s328 = scalar_lea.vmem %s2, %s327
      %s329 = smul.u32 16, %s23
      %p330 = scmp.lt.s32.totalorder %s329, 15
      %s331 = scalar_select %p330, %s329, 15
      %s332 = smul.addr %s331, 8
      %s333 = scalar_lea.vmem %s3, %s332
      %s334 = smul.u32 16, %s23
      %p335 = scmp.lt.s32.totalorder %s22, 1
      %s336 = scalar_select %p335, %s22, 1
      %s337 = smul.addr %s336, 8
      %s338 = scalar_lea.vmem %s7, %s337
      %v339 = vld [vmem:[%s321] sm:$0xff]
      %v340 = vld [vmem:[%s325] sm:$0xff]
      %v341 = vld [vmem:[%s325 + $0x8] sm:$0xff]
      %v342 = vld [vmem:[%s325 + $0x10] sm:$0xff]
      %v343 = vld [vmem:[%s325 + $0x18] sm:$0xff]
      %v344 = vld [vmem:[%s325 + $0x20] sm:$0xff]
      %v345 = vld [vmem:[%s325 + $0x28] sm:$0xff]
      %v346 = vld [vmem:[%s325 + $0x30] sm:$0xff]
      %v347 = vld [vmem:[%s325 + $0x38] sm:$0xff]
      %v348 = vld [vmem:[%s325 + $0x40] sm:$0xff]
      %v349 = vld [vmem:[%s325 + $0x48] sm:$0xff]
      %v350 = vld [vmem:[%s325 + $0x50] sm:$0xff]
      %v351 = vld [vmem:[%s325 + $0x58] sm:$0xff]
      %v352 = vld [vmem:[%s325 + $0x60] sm:$0xff]
      %v353 = vld [vmem:[%s325 + $0x68] sm:$0xff]
      %v354 = vld [vmem:[%s325 + $0x70] sm:$0xff]
      %v355 = vld [vmem:[%s325 + $0x78] sm:$0xff]
      %v356 = vld [vmem:[%s328] sm:$0x1]
      %v358 = vlaneseq
      %v359 = vshrl.u32 %v358, 7
      %v360 = vsub.s32 0, %v359
      %v361 = vrot.slane %v356, %v360
      %363 = vmatprep.subr.mxu0 0.0
      %364 = vmatpush1.msra.mxu0 %v340
      %365 = vmatprep.subr.mxu0 0.0
      %366 = vmatpush1.msra.mxu0 %v341
      %367 = vmatprep.subr.mxu0 0.0
      %368 = vmatpush1.msra.mxu0 %v342
      %369 = vmatprep.subr.mxu0 0.0
      %370 = vmatpush1.msra.mxu0 %v343
      %371 = vmatprep.subr.mxu0 0.0
      %372 = vmatpush1.msra.mxu0 %v344
      %373 = vmatprep.subr.mxu0 0.0
      %374 = vmatpush1.msra.mxu0 %v345
      %375 = vmatprep.subr.mxu0 0.0
      %376 = vmatpush1.msra.mxu0 %v346
      %377 = vmatprep.subr.mxu0 0.0
      %378 = vmatpush1.msra.mxu0 %v347
      %379 = vmatprep.subr.mxu0 0.0
      %380 = vmatpush1.msra.mxu0 %v348
      %381 = vmatprep.subr.mxu0 0.0
      %382 = vmatpush1.msra.mxu0 %v349
      %383 = vmatprep.subr.mxu0 0.0
      %384 = vmatpush1.msra.mxu0 %v350
      %385 = vmatprep.subr.mxu0 0.0
      %386 = vmatpush1.msra.mxu0 %v351
      %387 = vmatprep.subr.mxu0 0.0
      %388 = vmatpush1.msra.mxu0 %v352
      %389 = vmatprep.subr.mxu0 0.0
      %390 = vmatpush1.msra.mxu0 %v353
      %391 = vmatprep.subr.mxu0 0.0
      %392 = vmatpush1.msra.mxu0 %v354
      %393 = vmatprep.subr.mxu0 0.0
      %394 = vmatpush1.msra.mxu0 %v355
      %395 = vmatprep.subr.mxu0 0.0
      %396 = vmatpush1.msra.mxu0 0.0
      %397 = vmatprep.subr.mxu0 0.0
      %398 = vmatpush1.msra.mxu0 0.0
      %399 = vmatprep.subr.mxu0 0.0
      %400 = vmatpush1.msra.mxu0 0.0
      %401 = vmatprep.subr.mxu0 0.0
      %402 = vmatpush1.msra.mxu0 0.0
      %403 = vmatprep.subr.mxu0 0.0
      %404 = vmatpush1.msra.mxu0 0.0
      %405 = vmatprep.subr.mxu0 0.0
      %406 = vmatpush1.msra.mxu0 0.0
      %407 = vmatprep.subr.mxu0 0.0
      %408 = vmatpush1.msra.mxu0 0.0
      %409 = vmatprep.subr.mxu0 0.0
      %410 = vmatpush1.msra.mxu0 0.0
      %411 = vmatprep.subr.mxu0 0.0
      %412 = vmatpush1.msra.mxu0 0.0
      %413 = vmatprep.subr.mxu0 0.0
      %414 = vmatpush1.msra.mxu0 0.0
      %415 = vmatprep.subr.mxu0 0.0
      %416 = vmatpush1.msra.mxu0 0.0
      %417 = vmatprep.subr.mxu0 0.0
      %418 = vmatpush1.msra.mxu0 0.0
      %419 = vmatprep.subr.mxu0 0.0
      %420 = vmatpush1.msra.mxu0 0.0
      %421 = vmatprep.subr.mxu0 0.0
      %422 = vmatpush1.msra.mxu0 0.0
      %423 = vmatprep.subr.mxu0 0.0
      %424 = vmatpush1.msra.mxu0 0.0
      %425 = vmatprep.subr.mxu0 0.0
      %426 = vmatpush1.msra.mxu0 0.0
      %427 = vmatprep.mubr.f32.mxu0 0.0
      %428 = vmatmul.mubr.f32.gmra.mrb[0].mxu0 %v339
      %v429 = vpop.f32.mrb[0].mxu0
      %v430 = vadd.f32 %v361, %v429
      %v431 = vpop.f32.mrb[0].mxu0
      %432 = vdwg.mxu0
      %vm433 = vcmp.gt.f32.partialorder %v430, 0.0
      %v434 = vmul.f32 %v430, 1.050701
      %v435 = vmul.f32 %v430, 1.442695
      %v436 = vpow.pop %v435
      %v437 = vsub.f32 %v436, 1.0
      %v438 = vmul.f32 %v437, 1.7580993
      %v439 = vsel %vm433, %v434, %v438
      %v440 = vld [vmem:[%s333] sm:$0xff]
      %v441 = vld [vmem:[%s333 + $0x8] sm:$0xff]
      %v442 = vld [vmem:[%s333 + $0x10] sm:$0xff]
      %v443 = vld [vmem:[%s333 + $0x18] sm:$0xff]
      %v444 = vld [vmem:[%s333 + $0x20] sm:$0xff]
      %v445 = vld [vmem:[%s333 + $0x28] sm:$0xff]
      %v446 = vld [vmem:[%s333 + $0x30] sm:$0xff]
      %v447 = vld [vmem:[%s333 + $0x38] sm:$0xff]
      %v448 = vld [vmem:[%s333 + $0x40] sm:$0xff]
      %v449 = vld [vmem:[%s333 + $0x48] sm:$0xff]
      %v450 = vld [vmem:[%s333 + $0x50] sm:$0xff]
      %v451 = vld [vmem:[%s333 + $0x58] sm:$0xff]
      %v452 = vld [vmem:[%s333 + $0x60] sm:$0xff]
      %v453 = vld [vmem:[%s333 + $0x68] sm:$0xff]
      %v454 = vld [vmem:[%s333 + $0x70] sm:$0xff]
      %v455 = vld [vmem:[%s333 + $0x78] sm:$0xff]
      %456 = vmatprep.subr.mxu0 0.0
      %457 = vmatpush1.msra.mxu0 %v440
      %458 = vmatprep.subr.mxu0 0.0
      %459 = vmatpush1.msra.mxu0 %v441
      %460 = vmatprep.subr.mxu0 0.0
      %461 = vmatpush1.msra.mxu0 %v442
      %462 = vmatprep.subr.mxu0 0.0
      %463 = vmatpush1.msra.mxu0 %v443
      %464 = vmatprep.subr.mxu0 0.0
      %465 = vmatpush1.msra.mxu0 %v444
      %466 = vmatprep.subr.mxu0 0.0
      %467 = vmatpush1.msra.mxu0 %v445
      %468 = vmatprep.subr.mxu0 0.0
      %469 = vmatpush1.msra.mxu0 %v446
      %470 = vmatprep.subr.mxu0 0.0
      %471 = vmatpush1.msra.mxu0 %v447
      %472 = vmatprep.subr.mxu0 0.0
      %473 = vmatpush1.msra.mxu0 %v448
      %474 = vmatprep.subr.mxu0 0.0
      %475 = vmatpush1.msra.mxu0 %v449
      %476 = vmatprep.subr.mxu0 0.0
      %477 = vmatpush1.msra.mxu0 %v450
      %478 = vmatprep.subr.mxu0 0.0
      %479 = vmatpush1.msra.mxu0 %v451
      %480 = vmatprep.subr.mxu0 0.0
      %481 = vmatpush1.msra.mxu0 %v452
      %482 = vmatprep.subr.mxu0 0.0
      %483 = vmatpush1.msra.mxu0 %v453
      %484 = vmatprep.subr.mxu0 0.0
      %485 = vmatpush1.msra.mxu0 %v454
      %486 = vmatprep.subr.mxu0 0.0
      %487 = vmatpush1.msra.mxu0 %v455
      %488 = vmatprep.subr.mxu0 0.0
      %489 = vmatpush1.msra.mxu0 0.0
      %490 = vmatprep.subr.mxu0 0.0
      %491 = vmatpush1.msra.mxu0 0.0
      %492 = vmatprep.subr.mxu0 0.0
      %493 = vmatpush1.msra.mxu0 0.0
      %494 = vmatprep.subr.mxu0 0.0
      %495 = vmatpush1.msra.mxu0 0.0
      %496 = vmatprep.subr.mxu0 0.0
      %497 = vmatpush1.msra.mxu0 0.0
      %498 = vmatprep.subr.mxu0 0.0
      %499 = vmatpush1.msra.mxu0 0.0
      %500 = vmatprep.subr.mxu0 0.0
      %501 = vmatpush1.msra.mxu0 0.0
      %502 = vmatprep.subr.mxu0 0.0
      %503 = vmatpush1.msra.mxu0 0.0
      %504 = vmatprep.subr.mxu0 0.0
      %505 = vmatpush1.msra.mxu0 0.0
      %506 = vmatprep.subr.mxu0 0.0
      %507 = vmatpush1.msra.mxu0 0.0
      %508 = vmatprep.subr.mxu0 0.0
      %509 = vmatpush1.msra.mxu0 0.0
      %510 = vmatprep.subr.mxu0 0.0
      %511 = vmatpush1.msra.mxu0 0.0
      %512 = vmatprep.subr.mxu0 0.0
      %513 = vmatpush1.msra.mxu0 0.0
      %514 = vmatprep.subr.mxu0 0.0
      %515 = vmatpush1.msra.mxu0 0.0
      %516 = vmatprep.subr.mxu0 0.0
      %517 = vmatpush1.msra.mxu0 0.0
      %518 = vmatprep.subr.mxu0 0.0
      %519 = vmatpush1.msra.mxu0 0.0
      %520 = vmatprep.mubr.f32.mxu0 0.0
      %521 = vmatmul.mubr.f32.gmra.mrb[0].mxu0 %v439
      %v522 = vpop.f32.mrb[0].mxu0
      %v523 = vadd.f32 0.0, %v522
      %v524 = vpop.f32.mrb[0].mxu0
      %525 = vdwg.mxu0
      %p526 = scmp.eq.s32.totalorder %s23, 0
      // Predicated region
      $region49: #{position_wise_nn.1} parent=47 // pred_check
        %p527 = pneg %p526
      $region50: #{position_wise_nn.1} parent=47 // pred_check_branch
        %529 = sbr.rel (%p527) target = $region52
      $region51: #{position_wise_nn.1} parent=47 // pred_region
        %530 = vst [vmem:[#allocation2] sm:$0xff] 0.0
      $region52: #{position_wise_nn.1} parent=47 // pred_fallthru
        _
      %v531 = vld [vmem:[#allocation2] sm:$0xff]
      %v532 = vadd.f32 %v531, %v523
      %533 = vst [vmem:[#allocation2] sm:$0xff] %v532
      // Predicated region
      $region53: #{position_wise_nn.1} parent=47 // pred_check
        %p534 = pneg %p526
      $region54: #{position_wise_nn.1} parent=47 // pred_check_branch
        %536 = sbr.rel (%p534) target = $region56
      $region55: #{position_wise_nn.1} parent=47 // pred_region
        %v537 = vld [vmem:[#allocation2] sm:$0xff]
        %v538 = vld [vmem:[%s4] sm:$0x1]
        %v540 = vlaneseq
        %v541 = vshrl.u32 %v540, 7
        %v542 = vsub.s32 0, %v541
        %v543 = vrot.slane %v538, %v542
        %v545 = vadd.f32 %v537, %v543
        %v546 = vadd.f32 %v545, %v339
        %v547 = vlaneseq
        %v548 = vand.u32 %v547, 127
        %vm549 = vcmp.lt.s32.totalorder %v548, 32
        %v550 = vsel %vm549, 1, 0
        %vm551 = vcmp.eq.s32.totalorder %v550, 1
        %v552 = vsel %vm551, %v546, 0.0
        %553 = vadd.xlane.f32.xlu0 %v552
        %v554 = vpop.xlane.xlu0 %553
        %v555 = vrcp.pop 32.0
        %v556 = vmul.f32 %v554, %v555
        %v557 = vsub.f32 %v546, %v556
        %v558 = vsel %vm551, %v557, 0.0
        %v559 = vmul.f32 %v558, %v558
        %560 = vadd.xlane.f32.xlu0 %v559
        %v561 = vpop.xlane.xlu0 %560
        %v562 = vrcp.pop 31.0
        %v563 = vmul.f32 %v561, %v562
        %v564 = vrsqrt.pop %v563
        %v565 = vmul.f32 %v563, %v564
        %vm566 = vcmp.eq.f32.partialorder %v563, inf
        %v567 = vsel %vm566, %v563, %v565
        %vm568 = vcmp.eq.f32.partialorder %v563, 0.0
        %v569 = vand.u32 %v563, 2147483648
        %v570 = vsel %vm568, %v569, %v567
        %v571 = vadd.f32 %v570, 1e-08
        %v572 = vrcp.pop %v571
        %v573 = vmul.f32 1.0, %v572
        %v574 = vmul.f32 %v558, %v573
        %v575 = vld [vmem:[%s5] sm:$0x1]
        %v577 = vlaneseq
        %v578 = vshrl.u32 %v577, 7
        %v579 = vsub.s32 0, %v578
        %v580 = vrot.slane %v575, %v579
        %v582 = vmul.f32 %v574, %v580
        %v583 = vld [vmem:[%s6] sm:$0x1]
        %v585 = vlaneseq
        %v586 = vshrl.u32 %v585, 7
        %v587 = vsub.s32 0, %v586
        %v588 = vrot.slane %v583, %v587
        %v590 = vadd.f32 %v582, %v588
        %591 = vst [vmem:[%s338] sm:$0xff] %v590
      $region56: #{position_wise_nn.1} parent=47 // pred_fallthru
        _
      %p592 = scmp.lt.s32.totalorder %s22, 1
      %s593 = scalar_select %p592, %s22, 1
      %s594 = smul.addr %s593, 8
      %s595 = scalar_lea.vmem %s7, %s594
      // Predicated region
      $region57: #{position_wise_nn.1} parent=47 // pred_check
        %p596 = pneg %p215
      $region58: #{position_wise_nn.1} parent=47 // pred_check_branch
        %598 = sbr.rel (%p596) target = $region60
      $region59: #{position_wise_nn.1} parent=47 // pred_region
        _
      $region60: #{position_wise_nn.1} parent=47 // pred_fallthru
        _
    $region48: #{position_wise_nn.1} parent=5 // pred_fallthru
      _
    %p599 = scmp.le.s32.totalorder 2, %s13
    // Predicated region
    $region61: #{position_wise_nn.1} parent=5 // pred_check
      %p600 = pneg %p599
    $region62: #{position_wise_nn.1} parent=5 // pred_check_branch
      %602 = sbr.rel (%p600) target = $region64
    $region63: #{position_wise_nn.1} parent=5 // pred_region
      %s603 = ssub.s32 %s13, 2
      // Predicated region
      $region65: #{position_wise_nn.1} parent=63 // pred_check
        %p604 = pneg %p221
      $region66: #{position_wise_nn.1} parent=63 // pred_check_branch
        %606 = sbr.rel (%p604) target = $region68
      $region67: #{position_wise_nn.1} parent=63 // pred_region
        %p607 = scmp.lt.s32.totalorder %s24, 1
        %s608 = scalar_select %p607, %s24, 1
        %s609 = smul.addr %s608, 8
        %s610 = scalar_lea.vmem %s7, %s609
      $region68: #{position_wise_nn.1} parent=63 // pred_fallthru
        _
    $region64: #{position_wise_nn.1} parent=5 // pred_fallthru
      _
  $region6: #{position_wise_nn.1} parent=0 // loop_footer
    %s17 = sadd.s32 1, %s13
  $region7: #{position_wise_nn.1} parent=0 // loop_footer_branch
    %12 = sbr.rel target = $region3
  $region8: #{position_wise_nn.1} parent=0 // loop_exit
    _

</llo_original>
